<compile_context>
chip_gen: v6e
topology: v6e:2x2x1
jax: 0.10.0
libtpu: 0.0.40
codegen_flags: <defaults>
</compile_context>

<pallas_src>
import jax
import jax.numpy as jnp
from jax.experimental import pallas as pl
from jax.experimental.pallas import tpu as pltpu


# ---------------------------------------------------------------------------
# Tiling / VMEM sizing helpers
# ---------------------------------------------------------------------------
def _vmem_budget(resident_bytes):
    """Chip-aware VMEM budget (bytes) for the streamed, double-buffered W tiles."""
    try:
        cap = int(pltpu.get_tpu_info().vmem_capacity_bytes)  # 128 MiB v5e/v6e, 64 MiB v7x
    except Exception:
        cap = 64 << 20  # conservative fallback (interpret mode / older jax)
    cap = min(cap, 128 << 20)
    # ~40% of physical VMEM (capped at 48 MiB) for the W stream, minus the
    # grid-invariant residents (X, bias), leaving headroom for compiler scratch.
    budget = min(int(cap * 0.40), 48 << 20) - 2 * resident_bytes
    return max(budget, 4 << 20), cap


def _choose_tiling(O, K, B, elt_bytes, budget_bytes, cap_to=None):
    """Pick (TO, O_pad, n_par, n_inner) for the (n_par, n_inner) grid.

    TO      : output features per streamed W block (lane dim of the W tile)
    O_pad   : O padded up to n_par * n_inner * TO
    n_par   : leading "parallel" grid axis (2 feeds both v7x TensorCores)
    n_inner : inner "arbitrary" (running-max reduction) axis
    """
    # Per-output-feature VMEM cost per step: double-buffered W column
    # (2 * K * elt) + f32 matmul-result column + f32 running-max column
    # (2 * 2B * 4 bytes).
    per_feat = 2 * K * elt_bytes + 16 * B
    max_to = max(1, budget_bytes // per_feat)
    if cap_to is not None:
        max_to = min(max_to, cap_to)

    if O <= max_to and O < 256:
        # Single full-extent block: lane dim equals the array dim, one step.
        return O, O, 1, 1

    # Multiple lane-dense blocks: TO must be a multiple of 128. Prefer at least
    # two blocks so the "parallel" axis can use both v7x TensorCores.
    to = min(max_to, pl.cdiv(O, 2))
    to = max(128, (to // 128) * 128)
    o_pad = pl.cdiv(O, to) * to
    n_blocks = o_pad // to
    n_par = 2 if n_blocks % 2 == 0 else 1
    return to, o_pad, n_par, n_blocks // n_par


# ---------------------------------------------------------------------------
# Kernel
# ---------------------------------------------------------------------------
def _bilinear_triplet_kernel(x_ref, w_ref, b_ref, out_ref, acc_ref):
    """One grid step: scores for a block of TO bilinear output features.

    x_ref   : (2B, K)     stacked [a (x) p ; a (x) n] outer products (resident)
    w_ref   : (K, TO)     streamed W block, lane-dense
    b_ref   : (1, TO)     bias block (f32)
    out_ref : (1, 2B, 1)  per-chunk per-row maxima (written on the last step)
    acc_ref : (2B, TO)    f32 running max across this chunk's blocks
    """
    g = pl.program_id(1)

    @pl.when(g == 0)
    def _():
        acc_ref[...] = jnp.full(acc_ref.shape, -jnp.inf, acc_ref.dtype)

    # Single lane-dense MXU matmul per step; f32 accumulation.
    scores = jnp.dot(x_ref[...], w_ref[...], preferred_element_type=jnp.float32)
    acc_ref[...] = jnp.maximum(acc_ref[...], scores + b_ref[...])

    @pl.when(g == pl.num_programs(1) - 1)
    def _():
        # Cross-lane max over this chunk's TO output features -> (2B, 1).
        out_ref[0] = jnp.max(acc_ref[...], axis=1, keepdims=True)


# ---------------------------------------------------------------------------
# Wrapper
# ---------------------------------------------------------------------------
def bilinear_triplet_margin_loss(a, p, n, W, bias, margin=1.0,
                                 compute_dtype=jnp.bfloat16,
                                 max_block_features=None):
    """Forward pass of BilinearTripletMarginLoss.

    compute_dtype=jnp.bfloat16 streams X / W in bf16 (f32 MXU accumulation),
    halving the dominant HBM cost; use jnp.float32 for exact module numerics.
    max_block_features optionally caps the per-step output-feature block
    (mainly to exercise / control the multi-block path).
    """
    B, D1 = a.shape
    _, D2 = p.shape
    O = W.shape[0]
    K = D1 * D2

    # One-time layout work in XLA (outside the kernel):
    #   s[b, o] = sum_{ij} a[b,i] W[o,i,j] q[b,j] = (a (x) q) @ Wf
    #   with Wf[i*D2 + j, o] = W[o, i, j].
    # Stacking the positive/negative outer products makes the whole bilinear
    # form a single MXU matmul per streamed W block.
    Xp = (a[:, :, None] * p[:, None, :]).reshape(B, K)
    Xn = (a[:, :, None] * n[:, None, :]).reshape(B, K)
    X = jnp.concatenate([Xp, Xn], axis=0).astype(compute_dtype)           # (2B, K)
    Wf = jnp.transpose(W, (1, 2, 0)).reshape(K, O).astype(compute_dtype)  # (K, O)
    bias2 = bias.reshape(1, O).astype(jnp.float32)

    elt = jnp.dtype(compute_dtype).itemsize
    budget, cap = _vmem_budget(2 * B * K * elt)
    TO, O_pad, n_par, n_inner = _choose_tiling(O, K, B, elt, budget,
                                               cap_to=max_block_features)
    # NOTE: K = D1*D2 is not tiled; one (K, TO) W column plus the resident
    # (2B, K) X must fit in VMEM — fine for realistic nn.Bilinear sizes.
    # For very large B, add a batch tiling axis (not needed at these shapes).

    if O_pad != O:
        # Padded output features get zero weights and a -FLT_MAX bias so they
        # can never win the max.
        Wf = jnp.pad(Wf, ((0, 0), (0, O_pad - O)))
        bias2 = jnp.pad(bias2, ((0, 0), (0, O_pad - O)),
                        constant_values=float(jnp.finfo(jnp.float32).min))

    w_map = lambda c, g, _n=n_inner: (0, c * _n + g)

    chunk_max = pl.pallas_call(
        _bilinear_triplet_kernel,
        out_shape=jax.ShapeDtypeStruct((n_par, 2 * B, 1), jnp.float32),
        grid_spec=pltpu.PrefetchScalarGridSpec(
            num_scalar_prefetch=0,
            grid=(n_par, n_inner),                  # (parallel chunks, reduction)
            in_specs=[
                pl.BlockSpec((2 * B, K), lambda c, g: (0, 0)),   # X (grid-invariant)
                pl.BlockSpec((K, TO), w_map),                    # streamed W block
                pl.BlockSpec((1, TO), w_map),                    # bias block
            ],
            out_specs=pl.BlockSpec((1, 2 * B, 1), lambda c, g: (c, 0, 0)),
            scratch_shapes=[pltpu.VMEM((2 * B, TO), jnp.float32)],
        ),
        compiler_params=pltpu.CompilerParams(
            dimension_semantics=("parallel", "arbitrary"),
            vmem_limit_bytes=int(cap * 0.85),
        ),
    )(X, Wf, bias2)

    # Combine the per-chunk maxima (tiny) and finish the loss in XLA.
    m = jnp.max(chunk_max.reshape(n_par, 2 * B), axis=0)    # (2B,)
    dist_p, dist_n = m[:B], m[B:]
    return jnp.mean(jnp.maximum(dist_p - dist_n + float(margin), 0.0))


# ---------------------------------------------------------------------------
# References for validation
# ---------------------------------------------------------------------------
def _golden_reference(a, p, n, W, bias, margin):
    """Module-exact f32 reference (torch forward semantics)."""
    hp = jax.lax.Precision.HIGHEST
    sp = jnp.einsum('bi,oij,bj->bo', a, W, p, precision=hp) + bias
    sn = jnp.einsum('bi,oij,bj->bo', a, W, n, precision=hp) + bias
    return jnp.mean(jnp.maximum(sp.max(1) - sn.max(1) + margin, 0.0))


def _matched_reference(a, p, n, W, bias, margin, compute_dtype):
    """Same math with the same operand quantization the kernel uses (pure JAX)."""
    B, D1 = a.shape
    D2 = p.shape[1]
    O = W.shape[0]
    hp = jax.lax.Precision.HIGHEST
    cast = lambda x: x.astype(compute_dtype).astype(jnp.float32)
    Xp = cast((a[:, :, None] * p[:, None, :]).reshape(B, D1 * D2))
    Xn = cast((a[:, :, None] * n[:, None, :]).reshape(B, D1 * D2))
    Wf = cast(jnp.transpose(W, (1, 2, 0)).reshape(D1 * D2, O))
    sp = jnp.dot(Xp, Wf, precision=hp) + bias
    sn = jnp.dot(Xn, Wf, precision=hp) + bias
    return jnp.mean(jnp.maximum(sp.max(1) - sn.max(1) + margin, 0.0))


if __name__ == "__main__":
    key = jax.random.PRNGKey(0)

    # --- Tests 1/2: small shapes matching an nn.Bilinear(D1=32, D2=32, O=16). ---
    B, D1, D2, O = 8, 32, 32, 16
    margin = 1.0
    ka, kp, kn, kw, kb, k2 = jax.random.split(key, 6)
    a = jax.random.normal(ka, (B, D1), jnp.float32)
    p = jax.random.normal(kp, (B, D2), jnp.float32)
    n = jax.random.normal(kn, (B, D2), jnp.float32)
    bound = 1.0 / (D1 ** 0.5)   # torch.nn.Bilinear init range
    W = jax.random.uniform(kw, (O, D1, D2), jnp.float32, -bound, bound)
    bias = jax.random.uniform(kb, (O,), jnp.float32, -bound, bound)

    ref32 = _golden_reference(a, p, n, W, bias, margin)

    # Test 1: exact-numerics path (f32 W stream).
    loss_f32 = jax.block_until_ready(bilinear_triplet_margin_loss(
        a, p, n, W, bias, margin, compute_dtype=jnp.float32))
    assert abs(float(loss_f32) - float(ref32)) < 1e-3, (float(loss_f32), float(ref32))

    # Test 2: default perf path (bf16 W stream, f32 accumulation).
    loss_bf16 = jax.block_until_ready(
        bilinear_triplet_margin_loss(a, p, n, W, bias, margin))
    ref_bf16 = _matched_reference(a, p, n, W, bias, margin, jnp.bfloat16)
    assert abs(float(loss_bf16) - float(ref_bf16)) < 2e-3, (float(loss_bf16), float(ref_bf16))
    assert abs(float(loss_bf16) - float(ref32)) < 1e-1, (float(loss_bf16), float(ref32))

    # --- Test 3: multi-block path (O tiled + padded + split over the parallel axis). ---
    O2, D1b, D2b = 450, 16, 16
    kw2, kb2, ka2, kp2, kn2 = jax.random.split(k2, 5)
    bound2 = 1.0 / (D1b ** 0.5)
    W2 = jax.random.uniform(kw2, (O2, D1b, D2b), jnp.float32, -bound2, bound2)
    b2 = jax.random.uniform(kb2, (O2,), jnp.float32, -bound2, bound2)
    a2 = jax.random.normal(ka2, (B, D1b), jnp.float32)
    p2 = jax.random.normal(kp2, (B, D2b), jnp.float32)
    n2 = jax.random.normal(kn2, (B, D2b), jnp.float32)

    loss2 = jax.block_until_ready(bilinear_triplet_margin_loss(
        a2, p2, n2, W2, b2, margin, max_block_features=128))
    ref2_m = _matched_reference(a2, p2, n2, W2, b2, margin, jnp.bfloat16)
    ref2_g = _golden_reference(a2, p2, n2, W2, b2, margin)
    assert abs(float(loss2) - float(ref2_m)) < 2e-3, (float(loss2), float(ref2_m))
    assert abs(float(loss2) - float(ref2_g)) < 1e-1, (float(loss2), float(ref2_g))

    print("KERNEL_OK")
</pallas_src>

<mosaic_0001>
module attributes {stable_mosaic.version = 11 : i64} {
  func.func @_bilinear_triplet_kernel(%arg0: i32, %arg1: i32, %arg2: memref<16x1024xf32, #tpu.memory_space<vmem>>, %arg3: memref<1024x16xf32, #tpu.memory_space<vmem>>, %arg4: memref<1x16xf32, #tpu.memory_space<vmem>>, %arg5: memref<1x16x1xf32, #tpu.memory_space<vmem>>, %arg6: memref<16x16xf32, #tpu.memory_space<vmem>>) attributes {dimension_semantics = [#tpu.dimension_semantics<parallel>, #tpu.dimension_semantics<arbitrary>], iteration_bounds = array<i64: 1, 1>, scalar_prefetch = 0 : i64, scratch_operands = 1 : i64, tpu.core_type = #tpu.core_type<tc>, window_params = [{pipeline_mode = #tpu.pipeline_mode<synchronous>, transform_indices = @transform_0, window_bounds = array<i64: 16, 1024>}, {transform_indices = @transform_1, window_bounds = array<i64: 1024, 16>}, {transform_indices = @transform_2, window_bounds = array<i64: 1, 16>}, {transform_indices = @transform_3, window_bounds = array<i64: 1, 16, 1>}]} {
    %c0_i32 = arith.constant 0 : i32
    %0 = arith.cmpi eq, %arg1, %c0_i32 : i32
    %1 = arith.extui %0 : i1 to i32
    %c0_i32_0 = arith.constant 0 : i32
    %2 = arith.cmpi ne, %1, %c0_i32_0 : i32
    scf.if %2 {
      %cst_12 = arith.constant 0xFF800000 : f32
      %15 = vector.broadcast %cst_12 : f32 to vector<16x16xf32>
      %c0_13 = arith.constant 0 : index
      %c0_14 = arith.constant 0 : index
      %16 = vector.load %arg6[%c0_13, %c0_14] : memref<16x16xf32, #tpu.memory_space<vmem>>, vector<16x16xf32>
      tpu.vector_store %arg6[%c0_13, %c0_14], %15 {strides = array<i32>} : memref<16x16xf32, #tpu.memory_space<vmem>>, vector<16x16xf32>,
    } else {
    }
    %c0 = arith.constant 0 : index
    %c0_1 = arith.constant 0 : index
    %3 = vector.load %arg2[%c0, %c0_1] : memref<16x1024xf32, #tpu.memory_space<vmem>>, vector<16x1024xf32>
    %c0_2 = arith.constant 0 : index
    %c0_3 = arith.constant 0 : index
    %4 = vector.load %arg3[%c0_2, %c0_3] : memref<1024x16xf32, #tpu.memory_space<vmem>>, vector<1024x16xf32>
    %cst = arith.constant dense<0.000000e+00> : vector<16x16xf32>
    %5 = tpu.matmul %3, %4, %cst {dimension_numbers = #tpu.dot_dimension_numbers<[1], [0], [0], [1], [0, 0, 1, 1], [], []>} : vector<16x1024xf32>, vector<1024x16xf32>, vector<16x16xf32> -> vector<16x16xf32>
    %c0_4 = arith.constant 0 : index
    %c0_5 = arith.constant 0 : index
    %6 = vector.load %arg6[%c0_4, %c0_5] : memref<16x16xf32, #tpu.memory_space<vmem>>, vector<16x16xf32>
    %c0_6 = arith.constant 0 : index
    %c0_7 = arith.constant 0 : index
    %7 = vector.load %arg4[%c0_6, %c0_7] : memref<1x16xf32, #tpu.memory_space<vmem>>, vector<1x16xf32>
    %8 = vector.broadcast %7 : vector<1x16xf32> to vector<16x16xf32>
    %9 = arith.addf %5, %8 : vector<16x16xf32>
    %10 = arith.maximumf %6, %9 : vector<16x16xf32>
    %c0_8 = arith.constant 0 : index
    %c0_9 = arith.constant 0 : index
    %11 = vector.load %arg6[%c0_8, %c0_9] : memref<16x16xf32, #tpu.memory_space<vmem>>, vector<16x16xf32>
    tpu.vector_store %arg6[%c0_8, %c0_9], %10 {strides = array<i32>} : memref<16x16xf32, #tpu.memory_space<vmem>>, vector<16x16xf32>,
    %c0_i32_10 = arith.constant 0 : i32
    %12 = arith.cmpi eq, %arg1, %c0_i32_10 : i32
    %13 = arith.extui %12 : i1 to i32
    %c0_i32_11 = arith.constant 0 : i32
    %14 = arith.cmpi ne, %13, %c0_i32_11 : i32
    scf.if %14 {
      %c0_12 = arith.constant 0 : index
      %c0_13 = arith.constant 0 : index
      %15 = vector.load %arg6[%c0_12, %c0_13] : memref<16x16xf32, #tpu.memory_space<vmem>>, vector<16x16xf32>
      %cst_14 = arith.constant dense<0xFF800000> : vector<16xf32>
      %16 = vector.multi_reduction <maximumf>, %15, %cst_14 [1] : vector<16x16xf32> to vector<16xf32>
      %17 = vector.shape_cast %16 : vector<16xf32> to vector<16x1xf32>
      %c0_15 = arith.constant 0 : index
      %c0_16 = arith.constant 0 : index
      %c0_17 = arith.constant 0 : index
      %18 = vector.load %arg5[%c0_15, %c0_16, %c0_17] : memref<1x16x1xf32, #tpu.memory_space<vmem>>, vector<1x16x1xf32>
      %19 = vector.shape_cast %18 : vector<1x16x1xf32> to vector<16x1xf32>
      %20 = vector.shape_cast %17 : vector<16x1xf32> to vector<1x16x1xf32>
      tpu.vector_store %arg5[%c0_15, %c0_16, %c0_17], %20 {strides = array<i32>} : memref<1x16x1xf32, #tpu.memory_space<vmem>>, vector<1x16x1xf32>,
    } else {
    }
    return
  }
  func.func @transform_0(%arg0: i32, %arg1: i32) -> (i32, i32) {
    %c0_i32 = arith.constant 0 : i32
    %c0_i32_0 = arith.constant 0 : i32
    %c0_i32_1 = arith.constant 0 : i32
    return %c0_i32, %c0_i32_0 : i32, i32
  }
  func.func @transform_1(%arg0: i32, %arg1: i32) -> (i32, i32) {
    %c1_i32 = arith.constant 1 : i32
    %0 = arith.muli %arg0, %c1_i32 : i32
    %1 = arith.addi %0, %arg1 : i32
    %c0_i32 = arith.constant 0 : i32
    %c0_i32_0 = arith.constant 0 : i32
    return %c0_i32, %1 : i32, i32
  }
  func.func @transform_2(%arg0: i32, %arg1: i32) -> (i32, i32) {
    %c1_i32 = arith.constant 1 : i32
    %0 = arith.muli %arg0, %c1_i32 : i32
    %1 = arith.addi %0, %arg1 : i32
    %c0_i32 = arith.constant 0 : i32
    %c0_i32_0 = arith.constant 0 : i32
    return %c0_i32, %1 : i32, i32
  }
  func.func @transform_3(%arg0: i32, %arg1: i32) -> (i32, i32, i32) {
    %c0_i32 = arith.constant 0 : i32
    %c0_i32_0 = arith.constant 0 : i32
    %c0_i32_1 = arith.constant 0 : i32
    return %arg0, %c0_i32, %c0_i32_0 : i32, i32, i32
  }
}

</mosaic_0001>

<llo_original>
// kernel: tpu_custom_call.1
$region0: #{tpu_custom_call.1}
  #allocation0 [shape = 'u32[]', space=smem, size = 0x4, offset = 0x4, fixed_abs, tag = 'smem constant byte address 0x4 - core index']
  #allocation1 [shape = 'u32[144,128]{1,0:T(1,128)}', space=vmem, size = 0x12000, scoped, tag = 'internal scratch']
  #allocation2 [shape = 'f32[16,16]{1,0:T(8,128)}', space=vmem, size = 0x2000, scoped, tag = 'scratch operand']
  %s0 = inlined_call_operand.vmem [shape: f32[16,1024], index: 0, kind: input, shape index: {}]
  %s1 = inlined_call_operand.vmem [shape: f32[1024,16], index: 1, kind: input, shape index: {}]
  %s2 = inlined_call_operand.vmem [shape: f32[1,16], index: 2, kind: input, shape index: {}]
  %s3 = inlined_call_operand.vmem [shape: f32[1,16,1], index: 3, kind: output, shape index: {}]
  %s4 = sld [smem:[#allocation0]]
  $region30: #{tpu_custom_call.1} parent=0
    _
  %s6 = ssub.s32 1, %s4
  %s7 = scalar_select 0, %s6, %s4
  // Predicated region
  $region2: #{tpu_custom_call.1} parent=0 // pred_check
    _
  $region3: #{tpu_custom_call.1} parent=0 // pred_check_branch
    %9 = sbr.rel (0) target = $region5
  $region4: #{tpu_custom_call.1} parent=0 // pred_region
    _
  $region5: #{tpu_custom_call.1} parent=0 // pred_fallthru
    _
  // Predicated region
  $region6: #{tpu_custom_call.1} parent=0 // pred_check
    _
  $region7: #{tpu_custom_call.1} parent=0 // pred_check_branch
    %11 = sbr.rel (0) target = $region9
  $region8: #{tpu_custom_call.1} parent=0 // pred_region
    %s12 = sadd.s32 0, 0
    %p13 = scmp.lt.s32.totalorder %s12, 0
    %s14 = scalar_select %p13, %s12, 0
    %s15 = smul.addr %s14, 8
    %s16 = scalar_lea.vmem %s1, %s15
    %s17 = sadd.s32 0, 0
  $region9: #{tpu_custom_call.1} parent=0 // pred_fallthru
    _
  // Predicated region
  $region10: #{tpu_custom_call.1} parent=0 // pred_check
    _
  $region11: #{tpu_custom_call.1} parent=0 // pred_check_branch
    %19 = sbr.rel (0) target = $region13
  $region12: #{tpu_custom_call.1} parent=0 // pred_region
    %s20 = sadd.s32 0, 0
    %p21 = scmp.lt.s32.totalorder %s20, 0
    %s22 = scalar_select %p21, %s20, 0
    %s23 = scalar_lea.vmem %s2, %s22
    %s24 = sadd.s32 0, 0
  $region13: #{tpu_custom_call.1} parent=0 // pred_fallthru
    _
  %s25 = sadd.s32 0, 0
  %p26 = scmp.lt.s32.totalorder %s25, 0
  %s27 = scalar_select %p26, %s25, 0
  %s28 = smul.addr %s27, 8
  %s29 = scalar_lea.vmem %s1, %s28
  %s30 = sadd.s32 0, 0
  %p31 = scmp.lt.s32.totalorder %s30, 0
  %s32 = scalar_select %p31, %s30, 0
  %s33 = scalar_lea.vmem %s2, %s32
  %s34 = sadd.s32 0, 0
  %p35 = scmp.lt.s32.totalorder %s34, 0
  %s36 = scalar_select %p35, %s34, 0
  %s37 = smul.addr %s36, 8
  %s38 = scalar_lea.vmem %s1, %s37
  %s39 = sadd.s32 0, 0
  %s40 = sadd.s32 0, 0
  %p41 = scmp.lt.s32.totalorder %s40, 0
  %s42 = scalar_select %p41, %s40, 0
  %s43 = scalar_lea.vmem %s2, %s42
  %s44 = sadd.s32 0, 0
  %p45 = scmp.eq.s32.totalorder 0, 0
  // Predicated region
  $region14: #{tpu_custom_call.1} parent=0 // pred_check
    %p46 = pneg %p45
  $region15: #{tpu_custom_call.1} parent=0 // pred_check_branch
    %48 = sbr.rel (%p46) target = $region17
  $region16: #{tpu_custom_call.1} parent=0 // pred_region
    %vm49 = vcmask 130048
    %50 = vst.msk [vmem:[#allocation2] sm:$0xff] %vm49, -inf
    %51 = vst.msk [vmem:[#allocation2 + $0x8] sm:$0xff] %vm49, -inf
  $region17: #{tpu_custom_call.1} parent=0 // pred_fallthru
    _
  %v52 = vld [vmem:[%s0] sm:$0xff]
  %v53 = vld [vmem:[%s0 + $0x8] sm:$0xff]
  %v54 = vld [vmem:[%s0 + $0x10] sm:$0xff]
  %v55 = vld [vmem:[%s0 + $0x18] sm:$0xff]
  %v56 = vld [vmem:[%s0 + $0x20] sm:$0xff]
  %v57 = vld [vmem:[%s0 + $0x28] sm:$0xff]
  %v58 = vld [vmem:[%s0 + $0x30] sm:$0xff]
  %v59 = vld [vmem:[%s0 + $0x38] sm:$0xff]
  %v60 = vld [vmem:[%s0 + $0x40] sm:$0xff]
  %v61 = vld [vmem:[%s0 + $0x48] sm:$0xff]
  %v62 = vld [vmem:[%s0 + $0x50] sm:$0xff]
  %v63 = vld [vmem:[%s0 + $0x58] sm:$0xff]
  %v64 = vld [vmem:[%s0 + $0x60] sm:$0xff]
  %v65 = vld [vmem:[%s0 + $0x68] sm:$0xff]
  %v66 = vld [vmem:[%s0 + $0x70] sm:$0xff]
  %v67 = vld [vmem:[%s0 + $0x78] sm:$0xff]
  %v68 = vld [vmem:[%s38] sm:$0xff]
  %v69 = vld [vmem:[%s38 + $0x8] sm:$0xff]
  %v70 = vld [vmem:[%s38 + $0x10] sm:$0xff]
  %v71 = vld [vmem:[%s38 + $0x18] sm:$0xff]
  %v72 = vld [vmem:[%s38 + $0x20] sm:$0xff]
  %v73 = vld [vmem:[%s38 + $0x28] sm:$0xff]
  %v74 = vld [vmem:[%s38 + $0x30] sm:$0xff]
  %v75 = vld [vmem:[%s38 + $0x38] sm:$0xff]
  %v76 = vld [vmem:[%s38 + $0x40] sm:$0xff]
  %v77 = vld [vmem:[%s38 + $0x48] sm:$0xff]
  %v78 = vld [vmem:[%s38 + $0x50] sm:$0xff]
  %v79 = vld [vmem:[%s38 + $0x58] sm:$0xff]
  %v80 = vld [vmem:[%s38 + $0x60] sm:$0xff]
  %v81 = vld [vmem:[%s38 + $0x68] sm:$0xff]
  %v82 = vld [vmem:[%s38 + $0x70] sm:$0xff]
  %v83 = vld [vmem:[%s38 + $0x78] sm:$0xff]
  %v84 = vld [vmem:[%s38 + $0x80] sm:$0xff]
  %v85 = vld [vmem:[%s38 + $0x88] sm:$0xff]
  %v86 = vld [vmem:[%s38 + $0x90] sm:$0xff]
  %v87 = vld [vmem:[%s38 + $0x98] sm:$0xff]
  %v88 = vld [vmem:[%s38 + $0xa0] sm:$0xff]
  %v89 = vld [vmem:[%s38 + $0xa8] sm:$0xff]
  %v90 = vld [vmem:[%s38 + $0xb0] sm:$0xff]
  %v91 = vld [vmem:[%s38 + $0xb8] sm:$0xff]
  %v92 = vld [vmem:[%s38 + $0xc0] sm:$0xff]
  %v93 = vld [vmem:[%s38 + $0xc8] sm:$0xff]
  %v94 = vld [vmem:[%s38 + $0xd0] sm:$0xff]
  %v95 = vld [vmem:[%s38 + $0xd8] sm:$0xff]
  %v96 = vld [vmem:[%s38 + $0xe0] sm:$0xff]
  %v97 = vld [vmem:[%s38 + $0xe8] sm:$0xff]
  %v98 = vld [vmem:[%s38 + $0xf0] sm:$0xff]
  %v99 = vld [vmem:[%s38 + $0xf8] sm:$0xff]
  %v100 = vld [vmem:[%s38 + $0x100] sm:$0xff]
  %v101 = vld [vmem:[%s38 + $0x108] sm:$0xff]
  %v102 = vld [vmem:[%s38 + $0x110] sm:$0xff]
  %v103 = vld [vmem:[%s38 + $0x118] sm:$0xff]
  %v104 = vld [vmem:[%s38 + $0x120] sm:$0xff]
  %v105 = vld [vmem:[%s38 + $0x128] sm:$0xff]
  %v106 = vld [vmem:[%s38 + $0x130] sm:$0xff]
  %v107 = vld [vmem:[%s38 + $0x138] sm:$0xff]
  %v108 = vld [vmem:[%s38 + $0x140] sm:$0xff]
  %v109 = vld [vmem:[%s38 + $0x148] sm:$0xff]
  %v110 = vld [vmem:[%s38 + $0x150] sm:$0xff]
  %v111 = vld [vmem:[%s38 + $0x158] sm:$0xff]
  %v112 = vld [vmem:[%s38 + $0x160] sm:$0xff]
  %v113 = vld [vmem:[%s38 + $0x168] sm:$0xff]
  %v114 = vld [vmem:[%s38 + $0x170] sm:$0xff]
  %v115 = vld [vmem:[%s38 + $0x178] sm:$0xff]
  %v116 = vld [vmem:[%s38 + $0x180] sm:$0xff]
  %v117 = vld [vmem:[%s38 + $0x188] sm:$0xff]
  %v118 = vld [vmem:[%s38 + $0x190] sm:$0xff]
  %v119 = vld [vmem:[%s38 + $0x198] sm:$0xff]
  %v120 = vld [vmem:[%s38 + $0x1a0] sm:$0xff]
  %v121 = vld [vmem:[%s38 + $0x1a8] sm:$0xff]
  %v122 = vld [vmem:[%s38 + $0x1b0] sm:$0xff]
  %v123 = vld [vmem:[%s38 + $0x1b8] sm:$0xff]
  %v124 = vld [vmem:[%s38 + $0x1c0] sm:$0xff]
  %v125 = vld [vmem:[%s38 + $0x1c8] sm:$0xff]
  %v126 = vld [vmem:[%s38 + $0x1d0] sm:$0xff]
  %v127 = vld [vmem:[%s38 + $0x1d8] sm:$0xff]
  %v128 = vld [vmem:[%s38 + $0x1e0] sm:$0xff]
  %v129 = vld [vmem:[%s38 + $0x1e8] sm:$0xff]
  %v130 = vld [vmem:[%s38 + $0x1f0] sm:$0xff]
  %v131 = vld [vmem:[%s38 + $0x1f8] sm:$0xff]
  %v132 = vld [vmem:[%s38 + $0x200] sm:$0xff]
  %v133 = vld [vmem:[%s38 + $0x208] sm:$0xff]
  %v134 = vld [vmem:[%s38 + $0x210] sm:$0xff]
  %v135 = vld [vmem:[%s38 + $0x218] sm:$0xff]
  %v136 = vld [vmem:[%s38 + $0x220] sm:$0xff]
  %v137 = vld [vmem:[%s38 + $0x228] sm:$0xff]
  %v138 = vld [vmem:[%s38 + $0x230] sm:$0xff]
  %v139 = vld [vmem:[%s38 + $0x238] sm:$0xff]
  %v140 = vld [vmem:[%s38 + $0x240] sm:$0xff]
  %v141 = vld [vmem:[%s38 + $0x248] sm:$0xff]
  %v142 = vld [vmem:[%s38 + $0x250] sm:$0xff]
  %v143 = vld [vmem:[%s38 + $0x258] sm:$0xff]
  %v144 = vld [vmem:[%s38 + $0x260] sm:$0xff]
  %v145 = vld [vmem:[%s38 + $0x268] sm:$0xff]
  %v146 = vld [vmem:[%s38 + $0x270] sm:$0xff]
  %v147 = vld [vmem:[%s38 + $0x278] sm:$0xff]
  %v148 = vld [vmem:[%s38 + $0x280] sm:$0xff]
  %v149 = vld [vmem:[%s38 + $0x288] sm:$0xff]
  %v150 = vld [vmem:[%s38 + $0x290] sm:$0xff]
  %v151 = vld [vmem:[%s38 + $0x298] sm:$0xff]
  %v152 = vld [vmem:[%s38 + $0x2a0] sm:$0xff]
  %v153 = vld [vmem:[%s38 + $0x2a8] sm:$0xff]
  %v154 = vld [vmem:[%s38 + $0x2b0] sm:$0xff]
  %v155 = vld [vmem:[%s38 + $0x2b8] sm:$0xff]
  %v156 = vld [vmem:[%s38 + $0x2c0] sm:$0xff]
  %v157 = vld [vmem:[%s38 + $0x2c8] sm:$0xff]
  %v158 = vld [vmem:[%s38 + $0x2d0] sm:$0xff]
  %v159 = vld [vmem:[%s38 + $0x2d8] sm:$0xff]
  %v160 = vld [vmem:[%s38 + $0x2e0] sm:$0xff]
  %v161 = vld [vmem:[%s38 + $0x2e8] sm:$0xff]
  %v162 = vld [vmem:[%s38 + $0x2f0] sm:$0xff]
  %v163 = vld [vmem:[%s38 + $0x2f8] sm:$0xff]
  %v164 = vld [vmem:[%s38 + $0x300] sm:$0xff]
  %v165 = vld [vmem:[%s38 + $0x308] sm:$0xff]
  %v166 = vld [vmem:[%s38 + $0x310] sm:$0xff]
  %v167 = vld [vmem:[%s38 + $0x318] sm:$0xff]
  %v168 = vld [vmem:[%s38 + $0x320] sm:$0xff]
  %v169 = vld [vmem:[%s38 + $0x328] sm:$0xff]
  %v170 = vld [vmem:[%s38 + $0x330] sm:$0xff]
  %v171 = vld [vmem:[%s38 + $0x338] sm:$0xff]
  %v172 = vld [vmem:[%s38 + $0x340] sm:$0xff]
  %v173 = vld [vmem:[%s38 + $0x348] sm:$0xff]
  %v174 = vld [vmem:[%s38 + $0x350] sm:$0xff]
  %v175 = vld [vmem:[%s38 + $0x358] sm:$0xff]
  %v176 = vld [vmem:[%s38 + $0x360] sm:$0xff]
  %v177 = vld [vmem:[%s38 + $0x368] sm:$0xff]
  %v178 = vld [vmem:[%s38 + $0x370] sm:$0xff]
  %v179 = vld [vmem:[%s38 + $0x378] sm:$0xff]
  %v180 = vld [vmem:[%s38 + $0x380] sm:$0xff]
  %v181 = vld [vmem:[%s38 + $0x388] sm:$0xff]
  %v182 = vld [vmem:[%s38 + $0x390] sm:$0xff]
  %v183 = vld [vmem:[%s38 + $0x398] sm:$0xff]
  %v184 = vld [vmem:[%s38 + $0x3a0] sm:$0xff]
  %v185 = vld [vmem:[%s38 + $0x3a8] sm:$0xff]
  %v186 = vld [vmem:[%s38 + $0x3b0] sm:$0xff]
  %v187 = vld [vmem:[%s38 + $0x3b8] sm:$0xff]
  %v188 = vld [vmem:[%s38 + $0x3c0] sm:$0xff]
  %v189 = vld [vmem:[%s38 + $0x3c8] sm:$0xff]
  %v190 = vld [vmem:[%s38 + $0x3d0] sm:$0xff]
  %v191 = vld [vmem:[%s38 + $0x3d8] sm:$0xff]
  %v192 = vld [vmem:[%s38 + $0x3e0] sm:$0xff]
  %v193 = vld [vmem:[%s38 + $0x3e8] sm:$0xff]
  %v194 = vld [vmem:[%s38 + $0x3f0] sm:$0xff]
  %v195 = vld [vmem:[%s38 + $0x3f8] sm:$0xff]
  %v196 = vld [vmem:[#allocation2] sm:$0xff]
  %v197 = vld [vmem:[#allocation2 + $0x8] sm:$0xff]
  %v198 = vld [vmem:[%s43] sm:$0x1]
  %v200 = vlaneseq
  %v201 = vshrl.u32 %v200, 7
  %v202 = vsub.s32 0, %v201
  %v203 = vrot.slane %v198, %v202
  %205 = vmatprep.subr.mxu0 0.0
  %206 = vmatpush1.msra.mxu0 %v83
  %207 = vmatprep.subr.mxu0 0.0
  %208 = vmatpush1.msra.mxu0 %v82
  %209 = vmatprep.subr.mxu0 0.0
  %210 = vmatpush1.msra.mxu0 %v81
  %211 = vmatprep.subr.mxu0 0.0
  %212 = vmatpush1.msra.mxu0 %v80
  %213 = vmatprep.subr.mxu0 0.0
  %214 = vmatpush1.msra.mxu0 %v79
  %215 = vmatprep.subr.mxu0 0.0
  %216 = vmatpush1.msra.mxu0 %v78
  %217 = vmatprep.subr.mxu0 0.0
  %218 = vmatpush1.msra.mxu0 %v77
  %219 = vmatprep.subr.mxu0 0.0
  %220 = vmatpush1.msra.mxu0 %v76
  %221 = vmatprep.subr.mxu0 0.0
  %222 = vmatpush1.msra.mxu0 %v75
  %223 = vmatprep.subr.mxu0 0.0
  %224 = vmatpush1.msra.mxu0 %v74
  %225 = vmatprep.subr.mxu0 0.0
  %226 = vmatpush1.msra.mxu0 %v73
  %227 = vmatprep.subr.mxu0 0.0
  %228 = vmatpush1.msra.mxu0 %v72
  %229 = vmatprep.subr.mxu0 0.0
  %230 = vmatpush1.msra.mxu0 %v71
  %231 = vmatprep.subr.mxu0 0.0
  %232 = vmatpush1.msra.mxu0 %v70
  %233 = vmatprep.subr.mxu0 0.0
  %234 = vmatpush1.msra.mxu0 %v69
  %235 = vmatprep.subr.mxu0 0.0
  %236 = vmatpush1.msra.mxu0 %v68
  %237 = vmatprep.subr.mxu0 0.0
  %238 = vmatpush2.msra.mxu0 %v99
  %239 = vmatprep.subr.mxu0 0.0
  %240 = vmatpush2.msra.mxu0 %v98
  %241 = vmatprep.subr.mxu0 0.0
  %242 = vmatpush2.msra.mxu0 %v97
  %243 = vmatprep.subr.mxu0 0.0
  %244 = vmatpush2.msra.mxu0 %v96
  %245 = vmatprep.subr.mxu0 0.0
  %246 = vmatpush2.msra.mxu0 %v95
  %247 = vmatprep.subr.mxu0 0.0
  %248 = vmatpush2.msra.mxu0 %v94
  %249 = vmatprep.subr.mxu0 0.0
  %250 = vmatpush2.msra.mxu0 %v93
  %251 = vmatprep.subr.mxu0 0.0
  %252 = vmatpush2.msra.mxu0 %v92
  %253 = vmatprep.subr.mxu0 0.0
  %254 = vmatpush2.msra.mxu0 %v91
  %255 = vmatprep.subr.mxu0 0.0
  %256 = vmatpush2.msra.mxu0 %v90
  %257 = vmatprep.subr.mxu0 0.0
  %258 = vmatpush2.msra.mxu0 %v89
  %259 = vmatprep.subr.mxu0 0.0
  %260 = vmatpush2.msra.mxu0 %v88
  %261 = vmatprep.subr.mxu0 0.0
  %262 = vmatpush2.msra.mxu0 %v87
  %263 = vmatprep.subr.mxu0 0.0
  %264 = vmatpush2.msra.mxu0 %v86
  %265 = vmatprep.subr.mxu0 0.0
  %266 = vmatpush2.msra.mxu0 %v85
  %267 = vmatprep.subr.mxu0 0.0
  %268 = vmatpush2.msra.mxu0 %v84
  %269 = vmatprep.mubr.f32.mxu0 %v53
  %270 = vmatmul.mubr.f32.gmra.mxu0 %v52
  %v271 = vpop.f32.mrf.mxu0
  %v272 = vadd.f32 %v203, %v271
  %v273 = vpop.f32.mrf.mxu0
  %274 = vmatprep.mubr.f32.mxu0 %v61
  %275 = vmatmul.mubr.f32.gmra.mxu0 %v60
  %v276 = vpop.f32.mrf.mxu0
  %v277 = vadd.f32 %v203, %v276
  %v278 = vpop.f32.mrf.mxu0
  %279 = vdwg.mxu0
  %280 = vmatprep.subr.mxu0 0.0
  %281 = vmatpush1.msra.mxu0 %v115
  %282 = vmatprep.subr.mxu0 0.0
  %283 = vmatpush1.msra.mxu0 %v114
  %284 = vmatprep.subr.mxu0 0.0
  %285 = vmatpush1.msra.mxu0 %v113
  %286 = vmatprep.subr.mxu0 0.0
  %287 = vmatpush1.msra.mxu0 %v112
  %288 = vmatprep.subr.mxu0 0.0
  %289 = vmatpush1.msra.mxu0 %v111
  %290 = vmatprep.subr.mxu0 0.0
  %291 = vmatpush1.msra.mxu0 %v110
  %292 = vmatprep.subr.mxu0 0.0
  %293 = vmatpush1.msra.mxu0 %v109
  %294 = vmatprep.subr.mxu0 0.0
  %295 = vmatpush1.msra.mxu0 %v108
  %296 = vmatprep.subr.mxu0 0.0
  %297 = vmatpush1.msra.mxu0 %v107
  %298 = vmatprep.subr.mxu0 0.0
  %299 = vmatpush1.msra.mxu0 %v106
  %300 = vmatprep.subr.mxu0 0.0
  %301 = vmatpush1.msra.mxu0 %v105
  %302 = vmatprep.subr.mxu0 0.0
  %303 = vmatpush1.msra.mxu0 %v104
  %304 = vmatprep.subr.mxu0 0.0
  %305 = vmatpush1.msra.mxu0 %v103
  %306 = vmatprep.subr.mxu0 0.0
  %307 = vmatpush1.msra.mxu0 %v102
  %308 = vmatprep.subr.mxu0 0.0
  %309 = vmatpush1.msra.mxu0 %v101
  %310 = vmatprep.subr.mxu0 0.0
  %311 = vmatpush1.msra.mxu0 %v100
  %312 = vmatprep.subr.mxu0 0.0
  %313 = vmatpush2.msra.mxu0 %v131
  %314 = vmatprep.subr.mxu0 0.0
  %315 = vmatpush2.msra.mxu0 %v130
  %316 = vmatprep.subr.mxu0 0.0
  %317 = vmatpush2.msra.mxu0 %v129
  %318 = vmatprep.subr.mxu0 0.0
  %319 = vmatpush2.msra.mxu0 %v128
  %320 = vmatprep.subr.mxu0 0.0
  %321 = vmatpush2.msra.mxu0 %v127
  %322 = vmatprep.subr.mxu0 0.0
  %323 = vmatpush2.msra.mxu0 %v126
  %324 = vmatprep.subr.mxu0 0.0
  %325 = vmatpush2.msra.mxu0 %v125
  %326 = vmatprep.subr.mxu0 0.0
  %327 = vmatpush2.msra.mxu0 %v124
  %328 = vmatprep.subr.mxu0 0.0
  %329 = vmatpush2.msra.mxu0 %v123
  %330 = vmatprep.subr.mxu0 0.0
  %331 = vmatpush2.msra.mxu0 %v122
  %332 = vmatprep.subr.mxu0 0.0
  %333 = vmatpush2.msra.mxu0 %v121
  %334 = vmatprep.subr.mxu0 0.0
  %335 = vmatpush2.msra.mxu0 %v120
  %336 = vmatprep.subr.mxu0 0.0
  %337 = vmatpush2.msra.mxu0 %v119
  %338 = vmatprep.subr.mxu0 0.0
  %339 = vmatpush2.msra.mxu0 %v118
  %340 = vmatprep.subr.mxu0 0.0
  %341 = vmatpush2.msra.mxu0 %v117
  %342 = vmatprep.subr.mxu0 0.0
  %343 = vmatpush2.msra.mxu0 %v116
  %344 = vmatprep.mubr.f32.mxu0 %v55
  %345 = vmatmul.mubr.f32.gmra.mxu0 %v54
  %v346 = vpop.f32.mrf.mxu0
  %v347 = vadd.f32 %v272, %v346
  %v348 = vpop.f32.mrf.mxu0
  %349 = vmatprep.mubr.f32.mxu0 %v63
  %350 = vmatmul.mubr.f32.gmra.mxu0 %v62
  %v351 = vpop.f32.mrf.mxu0
  %v352 = vadd.f32 %v277, %v351
  %v353 = vpop.f32.mrf.mxu0
  %354 = vdwg.mxu0
  %355 = vmatprep.subr.mxu0 0.0
  %356 = vmatpush1.msra.mxu0 %v147
  %357 = vmatprep.subr.mxu0 0.0
  %358 = vmatpush1.msra.mxu0 %v146
  %359 = vmatprep.subr.mxu0 0.0
  %360 = vmatpush1.msra.mxu0 %v145
  %361 = vmatprep.subr.mxu0 0.0
  %362 = vmatpush1.msra.mxu0 %v144
  %363 = vmatprep.subr.mxu0 0.0
  %364 = vmatpush1.msra.mxu0 %v143
  %365 = vmatprep.subr.mxu0 0.0
  %366 = vmatpush1.msra.mxu0 %v142
  %367 = vmatprep.subr.mxu0 0.0
  %368 = vmatpush1.msra.mxu0 %v141
  %369 = vmatprep.subr.mxu0 0.0
  %370 = vmatpush1.msra.mxu0 %v140
  %371 = vmatprep.subr.mxu0 0.0
  %372 = vmatpush1.msra.mxu0 %v139
  %373 = vmatprep.subr.mxu0 0.0
  %374 = vmatpush1.msra.mxu0 %v138
  %375 = vmatprep.subr.mxu0 0.0
  %376 = vmatpush1.msra.mxu0 %v137
  %377 = vmatprep.subr.mxu0 0.0
  %378 = vmatpush1.msra.mxu0 %v136
  %379 = vmatprep.subr.mxu0 0.0
  %380 = vmatpush1.msra.mxu0 %v135
  %381 = vmatprep.subr.mxu0 0.0
  %382 = vmatpush1.msra.mxu0 %v134
  %383 = vmatprep.subr.mxu0 0.0
  %384 = vmatpush1.msra.mxu0 %v133
  %385 = vmatprep.subr.mxu0 0.0
  %386 = vmatpush1.msra.mxu0 %v132
  %387 = vmatprep.subr.mxu0 0.0
  %388 = vmatpush2.msra.mxu0 %v163
  %389 = vmatprep.subr.mxu0 0.0
  %390 = vmatpush2.msra.mxu0 %v162
  %391 = vmatprep.subr.mxu0 0.0
  %392 = vmatpush2.msra.mxu0 %v161
  %393 = vmatprep.subr.mxu0 0.0
  %394 = vmatpush2.msra.mxu0 %v160
  %395 = vmatprep.subr.mxu0 0.0
  %396 = vmatpush2.msra.mxu0 %v159
  %397 = vmatprep.subr.mxu0 0.0
  %398 = vmatpush2.msra.mxu0 %v158
  %399 = vmatprep.subr.mxu0 0.0
  %400 = vmatpush2.msra.mxu0 %v157
  %401 = vmatprep.subr.mxu0 0.0
  %402 = vmatpush2.msra.mxu0 %v156
  %403 = vmatprep.subr.mxu0 0.0
  %404 = vmatpush2.msra.mxu0 %v155
  %405 = vmatprep.subr.mxu0 0.0
  %406 = vmatpush2.msra.mxu0 %v154
  %407 = vmatprep.subr.mxu0 0.0
  %408 = vmatpush2.msra.mxu0 %v153
  %409 = vmatprep.subr.mxu0 0.0
  %410 = vmatpush2.msra.mxu0 %v152
  %411 = vmatprep.subr.mxu0 0.0
  %412 = vmatpush2.msra.mxu0 %v151
  %413 = vmatprep.subr.mxu0 0.0
  %414 = vmatpush2.msra.mxu0 %v150
  %415 = vmatprep.subr.mxu0 0.0
  %416 = vmatpush2.msra.mxu0 %v149
  %417 = vmatprep.subr.mxu0 0.0
  %418 = vmatpush2.msra.mxu0 %v148
  %419 = vmatprep.mubr.f32.mxu0 %v57
  %420 = vmatmul.mubr.f32.gmra.mxu0 %v56
  %v421 = vpop.f32.mrf.mxu0
  %v422 = vadd.f32 %v347, %v421
  %v423 = vpop.f32.mrf.mxu0
  %424 = vmatprep.mubr.f32.mxu0 %v65
  %425 = vmatmul.mubr.f32.gmra.mxu0 %v64
  %v426 = vpop.f32.mrf.mxu0
  %v427 = vadd.f32 %v352, %v426
  %v428 = vpop.f32.mrf.mxu0
  %429 = vdwg.mxu0
  %430 = vmatprep.subr.mxu0 0.0
  %431 = vmatpush1.msra.mxu0 %v179
  %432 = vmatprep.subr.mxu0 0.0
  %433 = vmatpush1.msra.mxu0 %v178
  %434 = vmatprep.subr.mxu0 0.0
  %435 = vmatpush1.msra.mxu0 %v177
  %436 = vmatprep.subr.mxu0 0.0
  %437 = vmatpush1.msra.mxu0 %v176
  %438 = vmatprep.subr.mxu0 0.0
  %439 = vmatpush1.msra.mxu0 %v175
  %440 = vmatprep.subr.mxu0 0.0
  %441 = vmatpush1.msra.mxu0 %v174
  %442 = vmatprep.subr.mxu0 0.0
  %443 = vmatpush1.msra.mxu0 %v173
  %444 = vmatprep.subr.mxu0 0.0
  %445 = vmatpush1.msra.mxu0 %v172
  %446 = vmatprep.subr.mxu0 0.0
  %447 = vmatpush1.msra.mxu0 %v171
  %448 = vmatprep.subr.mxu0 0.0
  %449 = vmatpush1.msra.mxu0 %v170
  %450 = vmatprep.subr.mxu0 0.0
  %451 = vmatpush1.msra.mxu0 %v169
  %452 = vmatprep.subr.mxu0 0.0
  %453 = vmatpush1.msra.mxu0 %v168
  %454 = vmatprep.subr.mxu0 0.0
  %455 = vmatpush1.msra.mxu0 %v167
  %456 = vmatprep.subr.mxu0 0.0
  %457 = vmatpush1.msra.mxu0 %v166
  %458 = vmatprep.subr.mxu0 0.0
  %459 = vmatpush1.msra.mxu0 %v165
  %460 = vmatprep.subr.mxu0 0.0
  %461 = vmatpush1.msra.mxu0 %v164
  %462 = vmatprep.subr.mxu0 0.0
  %463 = vmatpush2.msra.mxu0 %v195
  %464 = vmatprep.subr.mxu0 0.0
  %465 = vmatpush2.msra.mxu0 %v194
  %466 = vmatprep.subr.mxu0 0.0
  %467 = vmatpush2.msra.mxu0 %v193
  %468 = vmatprep.subr.mxu0 0.0
  %469 = vmatpush2.msra.mxu0 %v192
  %470 = vmatprep.subr.mxu0 0.0
  %471 = vmatpush2.msra.mxu0 %v191
  %472 = vmatprep.subr.mxu0 0.0
  %473 = vmatpush2.msra.mxu0 %v190
  %474 = vmatprep.subr.mxu0 0.0
  %475 = vmatpush2.msra.mxu0 %v189
  %476 = vmatprep.subr.mxu0 0.0
  %477 = vmatpush2.msra.mxu0 %v188
  %478 = vmatprep.subr.mxu0 0.0
  %479 = vmatpush2.msra.mxu0 %v187
  %480 = vmatprep.subr.mxu0 0.0
  %481 = vmatpush2.msra.mxu0 %v186
  %482 = vmatprep.subr.mxu0 0.0
  %483 = vmatpush2.msra.mxu0 %v185
  %484 = vmatprep.subr.mxu0 0.0
  %485 = vmatpush2.msra.mxu0 %v184
  %486 = vmatprep.subr.mxu0 0.0
  %487 = vmatpush2.msra.mxu0 %v183
  %488 = vmatprep.subr.mxu0 0.0
  %489 = vmatpush2.msra.mxu0 %v182
  %490 = vmatprep.subr.mxu0 0.0
  %491 = vmatpush2.msra.mxu0 %v181
  %492 = vmatprep.subr.mxu0 0.0
  %493 = vmatpush2.msra.mxu0 %v180
  %494 = vmatprep.mubr.f32.mxu0 %v59
  %495 = vmatmul.mubr.f32.gmra.mxu0 %v58
  %v496 = vpop.f32.mrf.mxu0
  %v497 = vadd.f32 %v422, %v496
  %v498 = vpop.f32.mrf.mxu0
  %499 = vmatprep.mubr.f32.mxu0 %v67
  %500 = vmatmul.mubr.f32.gmra.mxu0 %v66
  %v501 = vpop.f32.mrf.mxu0
  %v502 = vadd.f32 %v427, %v501
  %v503 = vpop.f32.mrf.mxu0
  %504 = vdwg.mxu0
  %v505 = vmax.f32 %v196, %v497
  %v506 = vmax.f32 %v197, %v502
  %vm507 = vcmask 130048
  %508 = vst.msk [vmem:[#allocation2] sm:$0xff] %vm507, %v505
  %509 = vst.msk [vmem:[#allocation2 + $0x8] sm:$0xff] %vm507, %v506
  // Predicated region
  $region18: #{tpu_custom_call.1} parent=0 // pred_check
    %p510 = pneg %p45
  $region19: #{tpu_custom_call.1} parent=0 // pred_check_branch
    %512 = sbr.rel (%p510) target = $region21
  $region20: #{tpu_custom_call.1} parent=0 // pred_region
    %v513 = vld [vmem:[#allocation2] sm:$0xff]
    %v514 = vld [vmem:[#allocation2 + $0x8] sm:$0xff]
    %v515 = vsel %vm507, %v513, -inf
    %516 = vmax.xlane.f32.xlu0 %v515
    %v517 = vpop.xlane.xlu0 %516
    %v518 = vsel %vm507, %v514, -inf
    %519 = vmax.xlane.f32.xlu0 %v518
    %v520 = vpop.xlane.xlu0 %519
    %vm521 = vcmask 7168
    %522 = vst.msk [vmem:[%s3] sm:$0xff] %vm521, %v517
    %523 = vst.msk [vmem:[%s3 + $0x8] sm:$0xff] %vm521, %v520
  $region21: #{tpu_custom_call.1} parent=0 // pred_fallthru
    _
  // Predicated region
  $region22: #{tpu_custom_call.1} parent=0 // pred_check
    _
  $region23: #{tpu_custom_call.1} parent=0 // pred_check_branch
    %525 = sbr.rel (0) target = $region25
  $region24: #{tpu_custom_call.1} parent=0 // pred_region
    _
  $region25: #{tpu_custom_call.1} parent=0 // pred_fallthru
    _
  // Predicated region
  $region26: #{tpu_custom_call.1} parent=0 // pred_check
    _
  $region27: #{tpu_custom_call.1} parent=0 // pred_check_branch
    %527 = sbr.rel (0) target = $region29
  $region28: #{tpu_custom_call.1} parent=0 // pred_region
    _
  $region29: #{tpu_custom_call.1} parent=0 // pred_fallthru
    _

</llo_original>
